<compile_context>
chip_gen: v5e
topology: v5e:2x2
jax: 0.10.0
libtpu: 0.0.40
codegen_flags: <defaults>
</compile_context>

<pallas_src>
import functools
import math

import jax
import jax.numpy as jnp
from jax.experimental import pallas as pl
from jax.experimental.pallas import tpu as pltpu


@functools.lru_cache(maxsize=None)
def _roll_is_np_convention():
    """True iff pltpu.roll(x, s)[i] == x[i - s] (numpy.roll convention)."""
    def probe(x_ref, o_ref):
        o_ref[...] = pltpu.roll(x_ref[...], 1, 1)

    try:
        x = jnp.broadcast_to(jnp.arange(128, dtype=jnp.int32)[None, :], (8, 128))
        out = pl.pallas_call(
            probe, out_shape=jax.ShapeDtypeStruct((8, 128), jnp.int32))(x)
        return int(out[0, 0]) == 127
    except Exception:
        return True


def _lcm(a, b):
    return a * b // math.gcd(a, b)


def _pick_lane_tile(HW, BW, C, itemsize):
    """Lane tile: multiple of lcm(k*W, 128) that divides HW, as large as possible while
    keeping (3 inputs + 1 output) x 2 pipeline buffers x (C, TL) well under VMEM."""
    base = _lcm(BW, 128)
    if HW % base != 0:
        return HW                              # full lane extent is always a legal block
    cap = max(base, min(16384, (12 << 20) // (8 * max(C, 1) * itemsize)))
    limit = min(HW, cap)
    candidates = [t for t in range(base, limit + 1, base) if HW % t == 0]
    if not candidates:
        return HW
    # Prefer >=2 lane blocks (helps megacore sharding on v7x) once blocks are big enough.
    multi = [t for t in candidates if HW // t >= 2]
    if multi and max(multi) >= 1024:
        return max(multi)
    return max(candidates)


def _make_kernel(k, W, TL, np_roll):
    inv_kk = 1.0 / float(k * k)

    # Butterfly shift amounts for a segmented all-reduce over each k x k spatial block,
    # flattened along the lane axis as offsets {r*W + d : r, d in [0, k)}.
    shifts = []
    p = 1
    while p < k:              # within-row (column) direction
        shifts.append(p)
        p *= 2
    p = W
    while p < k * W:          # across-row direction (stride W in the flat lane axis)
        shifts.append(p)
        p *= 2

    def kernel(x_ref, shift_ref, scale_ref, o_ref):
        y = shift_ref[...] * x_ref[...] + scale_ref[...]          # affine (VPU)
        s = y.astype(jnp.float32)                                  # f32 accumulation
        lane = jax.lax.broadcasted_iota(jnp.int32, s.shape, s.ndim - 1)
        for p in shifts:
            if p & (p - 1) == 0:
                low = (lane & p) == 0                              # (lane // p) % 2 == 0
            else:
                low = (lane // p) % 2 == 0
            a = pltpu.roll(s, TL - p, s.ndim - 1)                  # np conv.: s[l + p]
            b = pltpu.roll(s, p, s.ndim - 1)                       # np conv.: s[l - p]
            if np_roll:
                s = s + jnp.where(low, a, b)
            else:
                s = s + jnp.where(low, b, a)
        o_ref[...] = (y + s * inv_kk).astype(o_ref.dtype)          # y + block mean

    return kernel


def alpha_convolution_forward(x, shift, scale, kernel_size=2):
    """x: (N,C,H,W); shift/scale: (1,C,H,W).  Returns (output (N,C,H,W), logabsdet (1,))."""
    N, C, H, W = x.shape
    k = int(kernel_size)
    assert H % k == 0 and W % k == 0, "spatial dims must be divisible by kernel_size"
    assert k & (k - 1) == 0, "kernel_size must be a power of two"
    assert shift.shape == (1, C, H, W) and scale.shape == (1, C, H, W)

    HW = H * W
    BW = k * W                                  # lanes spanned by one k-row block group
    TL = _pick_lane_tile(HW, BW, C, jnp.dtype(x.dtype).itemsize)
    grid = (HW // TL, N)                        # batch innermost -> param tiles reused

    # Free reshapes (contiguous, no data movement).
    x3 = x.reshape(N, C, HW)
    sh3 = shift.reshape(1, C, HW)
    sc3 = scale.reshape(1, C, HW)

    kernel = _make_kernel(k, W, TL, _roll_is_np_convention())

    out3 = pl.pallas_call(
        kernel,
        out_shape=jax.ShapeDtypeStruct((N, C, HW), x.dtype),
        grid_spec=pltpu.PrefetchScalarGridSpec(
            num_scalar_prefetch=0,
            grid=grid,
            in_specs=[
                pl.BlockSpec((None, C, TL), lambda j, n: (n, 0, j)),
                pl.BlockSpec((None, C, TL), lambda j, n: (0, 0, j)),  # reused over batch
                pl.BlockSpec((None, C, TL), lambda j, n: (0, 0, j)),  # reused over batch
            ],
            out_specs=pl.BlockSpec((None, C, TL), lambda j, n: (n, 0, j)),
        ),
        compiler_params=pltpu.CompilerParams(
            dimension_semantics=("parallel", "parallel"),
            vmem_limit_bytes=32 * 1024 * 1024,
        ),
    )(x3, sh3, sc3)

    output = out3.reshape(N, C, H, W)

    # TODO(synk): slogdet (LU-based) has no clean Pallas TPU primitive; parameter-only,
    # computed in plain JAX.
    logabsdet = jnp.linalg.slogdet(shift * 2.0)[1].sum().reshape(1)
    return output, logabsdet


def _reference_forward(x, shift, scale, kernel_size=2):
    """Pure-JAX reference matching the PyTorch module."""
    k = kernel_size
    N, C, H, W = x.shape
    y = shift * x + scale
    pooled = y.reshape(N, C, H // k, k, W // k, k).sum(axis=(3, 5))
    up = jnp.repeat(jnp.repeat(pooled, k, axis=2), k, axis=3) / (k * k)
    out = y + up
    logabsdet = jnp.linalg.slogdet(shift * 2.0)[1].sum().reshape(1)
    return out, logabsdet


if __name__ == "__main__":
    # Module invariant: H = W = 64 // (num_features // 3).  num_features=12 -> H=W=16.
    num_features = 12
    kernel_size = 2
    H = Wd = 64 // (num_features // 3)   # 16
    N = 2

    key = jax.random.PRNGKey(0)
    k_x, k_shift, k_scale = jax.random.split(key, 3)
    x = jax.random.normal(k_x, (N, num_features, H, Wd), dtype=jnp.float32)
    shift = jax.random.normal(k_shift, (1, num_features, H, Wd), dtype=jnp.float32)
    scale = jax.random.normal(k_scale, (1, num_features, H, Wd), dtype=jnp.float32)

    out, logabsdet = alpha_convolution_forward(x, shift, scale, kernel_size)
    out = jax.block_until_ready(out)
    logabsdet = jax.block_until_ready(logabsdet)

    ref_out, ref_lad = _reference_forward(x, shift, scale, kernel_size)
    assert out.shape == (N, num_features, H, Wd)
    assert logabsdet.shape == (1,)
    assert jnp.allclose(out, ref_out, atol=1e-5, rtol=1e-5)
    assert jnp.allclose(logabsdet, ref_lad, atol=1e-4, rtol=1e-5)

    print("KERNEL_OK")
</pallas_src>

<mosaic_0001>
module attributes {stable_mosaic.version = 11 : i64} {
  func.func @probe(%arg0: memref<8x128xi32, #tpu.memory_space<vmem>>, %arg1: memref<8x128xi32, #tpu.memory_space<vmem>>) attributes {dimension_semantics = [], scalar_prefetch = 0 : i64, scratch_operands = 0 : i64, tpu.core_type = #tpu.core_type<tc>} {
    %c0 = arith.constant 0 : index
    %c0_0 = arith.constant 0 : index
    %0 = vector.load %arg0[%c0, %c0_0] : memref<8x128xi32, #tpu.memory_space<vmem>>, vector<8x128xi32>
    %c1_i32 = arith.constant 1 : i32
    %1 = tpu.dynamic_rotate %0 by %c1_i32 dim 1 : vector<8x128xi32>, i32 -> vector<8x128xi32>
    %c0_1 = arith.constant 0 : index
    %c0_2 = arith.constant 0 : index
    %2 = vector.load %arg1[%c0_1, %c0_2] : memref<8x128xi32, #tpu.memory_space<vmem>>, vector<8x128xi32>
    tpu.vector_store %arg1[%c0_1, %c0_2], %1 {strides = array<i32>} : memref<8x128xi32, #tpu.memory_space<vmem>>, vector<8x128xi32>,
    return
  }
}

module attributes {stable_mosaic.version = 11 : i64} {
  func.func @kernel(%arg0: i32, %arg1: i32, %arg2: memref<1x12x256xf32, #tpu.memory_space<vmem>>, %arg3: memref<1x12x256xf32, #tpu.memory_space<vmem>>, %arg4: memref<1x12x256xf32, #tpu.memory_space<vmem>>, %arg5: memref<1x12x256xf32, #tpu.memory_space<vmem>>) attributes {dimension_semantics = [#tpu.dimension_semantics<parallel>, #tpu.dimension_semantics<parallel>], iteration_bounds = array<i64: 1, 2>, scalar_prefetch = 0 : i64, scratch_operands = 0 : i64, tpu.core_type = #tpu.core_type<tc>, window_params = [{transform_indices = @transform_0, window_bounds = array<i64: 1, 12, 256>}, {transform_indices = @transform_1, window_bounds = array<i64: 1, 12, 256>}, {transform_indices = @transform_2, window_bounds = array<i64: 1, 12, 256>}, {transform_indices = @transform_3, window_bounds = array<i64: 1, 12, 256>}]} {
    %c0 = arith.constant 0 : index
    %c0_0 = arith.constant 0 : index
    %c0_1 = arith.constant 0 : index
    %0 = vector.load %arg3[%c0, %c0_0, %c0_1] : memref<1x12x256xf32, #tpu.memory_space<vmem>>, vector<1x12x256xf32>
    %1 = vector.shape_cast %0 : vector<1x12x256xf32> to vector<12x256xf32>
    %c0_2 = arith.constant 0 : index
    %c0_3 = arith.constant 0 : index
    %c0_4 = arith.constant 0 : index
    %2 = vector.load %arg2[%c0_2, %c0_3, %c0_4] : memref<1x12x256xf32, #tpu.memory_space<vmem>>, vector<1x12x256xf32>
    %3 = vector.shape_cast %2 : vector<1x12x256xf32> to vector<12x256xf32>
    %4 = arith.mulf %1, %3 : vector<12x256xf32>
    %c0_5 = arith.constant 0 : index
    %c0_6 = arith.constant 0 : index
    %c0_7 = arith.constant 0 : index
    %5 = vector.load %arg4[%c0_5, %c0_6, %c0_7] : memref<1x12x256xf32, #tpu.memory_space<vmem>>, vector<1x12x256xf32>
    %6 = vector.shape_cast %5 : vector<1x12x256xf32> to vector<12x256xf32>
    %7 = arith.addf %4, %6 : vector<12x256xf32>
    %8 = tpu.iota {dimensions = array<i32: 1>} : vector<12x256xi32>
    %c1_i32 = arith.constant 1 : i32
    %9 = vector.broadcast %c1_i32 : i32 to vector<12x256xi32>
    %10 = arith.andi %8, %9 : vector<12x256xi32>
    %c0_i32 = arith.constant 0 : i32
    %11 = vector.broadcast %c0_i32 : i32 to vector<12x256xi32>
    %12 = arith.cmpi eq, %10, %11 : vector<12x256xi32>
    %c255_i32 = arith.constant 255 : i32
    %13 = tpu.dynamic_rotate %7 by %c255_i32 dim 1 : vector<12x256xf32>, i32 -> vector<12x256xf32>
    %c1_i32_8 = arith.constant 1 : i32
    %14 = tpu.dynamic_rotate %7 by %c1_i32_8 dim 1 : vector<12x256xf32>, i32 -> vector<12x256xf32>
    %15 = arith.select %12, %13, %14 : vector<12x256xi1>, vector<12x256xf32>
    %16 = arith.addf %7, %15 : vector<12x256xf32>
    %c16_i32 = arith.constant 16 : i32
    %17 = vector.broadcast %c16_i32 : i32 to vector<12x256xi32>
    %18 = arith.andi %8, %17 : vector<12x256xi32>
    %c0_i32_9 = arith.constant 0 : i32
    %19 = vector.broadcast %c0_i32_9 : i32 to vector<12x256xi32>
    %20 = arith.cmpi eq, %18, %19 : vector<12x256xi32>
    %c240_i32 = arith.constant 240 : i32
    %21 = tpu.dynamic_rotate %16 by %c240_i32 dim 1 : vector<12x256xf32>, i32 -> vector<12x256xf32>
    %c16_i32_10 = arith.constant 16 : i32
    %22 = tpu.dynamic_rotate %16 by %c16_i32_10 dim 1 : vector<12x256xf32>, i32 -> vector<12x256xf32>
    %23 = arith.select %20, %21, %22 : vector<12x256xi1>, vector<12x256xf32>
    %24 = arith.addf %16, %23 : vector<12x256xf32>
    %cst = arith.constant 2.500000e-01 : f32
    %25 = vector.broadcast %cst : f32 to vector<12x256xf32>
    %26 = arith.mulf %24, %25 : vector<12x256xf32>
    %27 = arith.addf %7, %26 : vector<12x256xf32>
    %c0_11 = arith.constant 0 : index
    %c0_12 = arith.constant 0 : index
    %c0_13 = arith.constant 0 : index
    %28 = vector.load %arg5[%c0_11, %c0_12, %c0_13] : memref<1x12x256xf32, #tpu.memory_space<vmem>>, vector<1x12x256xf32>
    %29 = vector.shape_cast %28 : vector<1x12x256xf32> to vector<12x256xf32>
    %30 = vector.shape_cast %27 : vector<12x256xf32> to vector<1x12x256xf32>
    tpu.vector_store %arg5[%c0_11, %c0_12, %c0_13], %30 {strides = array<i32>} : memref<1x12x256xf32, #tpu.memory_space<vmem>>, vector<1x12x256xf32>,
    return
  }
  func.func @transform_0(%arg0: i32, %arg1: i32) -> (i32, i32, i32) {
    %c0_i32 = arith.constant 0 : i32
    %c0_i32_0 = arith.constant 0 : i32
    return %arg1, %c0_i32, %arg0 : i32, i32, i32
  }
  func.func @transform_1(%arg0: i32, %arg1: i32) -> (i32, i32, i32) {
    %c0_i32 = arith.constant 0 : i32
    %c0_i32_0 = arith.constant 0 : i32
    %c0_i32_1 = arith.constant 0 : i32
    return %c0_i32, %c0_i32_0, %arg0 : i32, i32, i32
  }
  func.func @transform_2(%arg0: i32, %arg1: i32) -> (i32, i32, i32) {
    %c0_i32 = arith.constant 0 : i32
    %c0_i32_0 = arith.constant 0 : i32
    %c0_i32_1 = arith.constant 0 : i32
    return %c0_i32, %c0_i32_0, %arg0 : i32, i32, i32
  }
  func.func @transform_3(%arg0: i32, %arg1: i32) -> (i32, i32, i32) {
    %c0_i32 = arith.constant 0 : i32
    %c0_i32_0 = arith.constant 0 : i32
    return %arg1, %c0_i32, %arg0 : i32, i32, i32
  }
}

</mosaic_0001>

<llo_original>
// kernel: tpu_custom_call.1
$region0: #{tpu_custom_call.1}
  #allocation0 [shape = 'u32[]', space=smem, size = 0x4, offset = 0x4, fixed_abs, tag = 'smem constant byte address 0x4 - core index']
  #allocation1 [shape = 'u32[72,128]{1,0:T(1,128)}', space=vmem, size = 0x9000, scoped, tag = 'internal scratch']
  %s0 = inlined_call_operand.hbm [shape: s32[8,128], index: 0, kind: input, shape index: {}]
  %s1 = inlined_call_operand.hbm [shape: s32[8,128], index: 1, kind: output, shape index: {}]
  %s2 = sld [smem:[#allocation0]]
  $region18: #{tpu_custom_call.1} parent=0
    _
  %s4 = ssub.s32 1, %s2
  %s5 = scalar_select 0, %s4, %s2
  $region1: #{tpu_custom_call.1} parent=0
    #allocation2 [shape = 'u8[4096]{0}', space=vmem, size = 0x1000, scoped, tag = 'input window, operand 0, single buffered']
    #allocation3 [shape = 's32[1]{0}', space=sflag, size = 0x4, scoped, tag = 'scoped memory for tpu_custom_call.1']
    #allocation4 [shape = 's32[1]{0}', space=sflag, size = 0x4, scoped, tag = 'scoped memory for tpu_custom_call.1']
    #allocation5 [shape = 'u8[4096]{0}', space=vmem, size = 0x1000, scoped, tag = 'output window, operand 0, single buffered']
    %6 = vsyncpa [#allocation3], 0
    %7 = vsyncpa [#allocation4], 0
    // Predicated region
    $region2: #{tpu_custom_call.1} parent=1 // pred_check
      _
    $region3: #{tpu_custom_call.1} parent=1 // pred_check_branch
      %9 = sbr.rel (0) target = $region5
    $region4: #{tpu_custom_call.1} parent=1 // pred_region
      %11 = vsyncadd [#allocation3], 0
      %s13 = sshll.u32 %s0, 4
      %s14 = int_to_ptr.hbm [resolvable:$true] %s13
      %s15 = sshll.u32 [#allocation2], 4
      %s16 = int_to_ptr.vmem [resolvable:$true] %s15
      %18 = dma.hbm_to_vmem [thread:$0]  %s14, 128, %s16, [#allocation3]
    $region5: #{tpu_custom_call.1} parent=1 // pred_fallthru
      _
    // Predicated region
    $region6: #{tpu_custom_call.1} parent=1 // pred_check
      _
    $region7: #{tpu_custom_call.1} parent=1 // pred_check_branch
      %20 = sbr.rel (0) target = $region9
    $region8: #{tpu_custom_call.1} parent=1 // pred_region
      %22 = dma.done [#allocation3], 128
    $region9: #{tpu_custom_call.1} parent=1 // pred_fallthru
      _
    %v23 = vld [vmem:[#allocation2] sm:$0xff]
    %24 = vrot.lane.b32.xlu0 %v23, 1
    %v25 = vpop.permute.xlu0 %24
    %26 = vst [vmem:[#allocation5] sm:$0xff] %v25
    // Predicated region
    $region10: #{tpu_custom_call.1} parent=1 // pred_check
      _
    $region11: #{tpu_custom_call.1} parent=1 // pred_check_branch
      %28 = sbr.rel (0) target = $region13
    $region12: #{tpu_custom_call.1} parent=1 // pred_region
      %30 = vsyncadd [#allocation4], 0
      %s32 = sshll.u32 [#allocation5], 4
      %s33 = int_to_ptr.vmem [resolvable:$true] %s32
      %s34 = sshll.u32 %s1, 4
      %s35 = int_to_ptr.hbm [resolvable:$true] %s34
      %37 = dma.vmem_to_hbm [thread:$0]  %s33, 128, %s35, [#allocation4]
    $region13: #{tpu_custom_call.1} parent=1 // pred_fallthru
      _
    // Predicated region
    $region14: #{tpu_custom_call.1} parent=1 // pred_check
      _
    $region15: #{tpu_custom_call.1} parent=1 // pred_check_branch
      %39 = sbr.rel (0) target = $region17
    $region16: #{tpu_custom_call.1} parent=1 // pred_region
      %41 = dma.done [#allocation4], 128
    $region17: #{tpu_custom_call.1} parent=1 // pred_fallthru
      _
    %42 = vsyncpa [#allocation3], 1
    %43 = vsyncpa [#allocation4], 1

// kernel: tpu_custom_call.1
$region0: #{tpu_custom_call.1}
  #allocation0 [shape = 'u32[]', space=smem, size = 0x4, offset = 0x4, fixed_abs, tag = 'smem constant byte address 0x4 - core index']
  #allocation1 [shape = 'u32[72,128]{1,0:T(1,128)}', space=vmem, size = 0x9000, scoped, tag = 'internal scratch']
  %s0 = inlined_call_operand.vmem [shape: f32[2,12,256], index: 0, kind: input, shape index: {}]
  %s1 = inlined_call_operand.vmem [shape: f32[1,12,256], index: 1, kind: input, shape index: {}]
  %s2 = inlined_call_operand.vmem [shape: f32[1,12,256], index: 2, kind: input, shape index: {}]
  %s3 = inlined_call_operand.vmem [shape: f32[2,12,256], index: 3, kind: output, shape index: {}]
  %s4 = sld [smem:[#allocation0]]
  $region45: #{tpu_custom_call.1} parent=0
    _
  %s6 = ssub.s32 1, %s4
  %s7 = scalar_select 0, %s6, %s4
  loop: start=0, step=1, limit=4
  $region2: #{tpu_custom_call.1} parent=0 // loop_pre_header
    _
  $region3: #{tpu_custom_call.1} parent=0 // loop_header
    %s9 = sphi 0, %s13
    %p10 = scmp.ge.s32.totalorder %s9, 4
    %s16 = sphi 0, %s28
    %s17 = sphi 0, %s24
    %s18 = sphi 0, %s16
    %s19 = sphi 0, %s17
    %s20 = sphi 0, %s18
    %s21 = sphi 0, %s19
    %s33 = sphi 0, %s35
    %s36 = sphi 0, %s33
    %s37 = sphi 0, %s36
    %s53 = sphi 0, %s37
    %s59 = sphi 0, %s61
    %s62 = sphi 0, %s59
    %s63 = sphi 0, %s62
    %s79 = sphi 0, %s63
    %s85 = sphi 0, %s87
    %s88 = sphi 0, %s85
    %s89 = sphi 0, %s88
    %s105 = sphi 0, %s89
    %s113 = sphi 0, %s115
    %s116 = sphi 0, %s113
    %s117 = sphi 0, %s116
    %s133 = sphi 0, %s117
  $region4: #{tpu_custom_call.1} parent=0 // loop_header_branch
    %12 = sbr.rel (%p10) target = $region8
  $region5: #{tpu_custom_call.1} parent=0 // loop_body
    %s14 = ssub.s32 %s9, 1
    %s15 = ssub.s32 %s9, 2
    %s22 = sadd.s32 1, %s17
    %p23 = scmp.ge.s32.totalorder %s22, 2
    %s24 = scalar_select %p23, 0, %s22
    %s25 = sadd.s32 1, %s16
    %s26 = scalar_select %p23, %s25, %s16
    %p27 = scmp.ge.s32.totalorder %s26, 1
    %s28 = scalar_select %p27, 0, %s26
    %s29 = ssub.s32 %s17, %s24
    %s30 = ssub.s32 %s16, %s28
    %s31 = sor.u32 %s29, %s30
    %p32 = scmp.eq.s32.totalorder %s31, 0
    %s34 = sadd.s32 %s33, 1
    %s35 = scalar_select %p32, %s33, %s34
    %p38 = pneg %p32
    %p39 = scmp.eq.s32.totalorder %s9, 1
    %p40 = por %p38, %p39
    %p41 = scmp.ne.s32.totalorder %s33, %s36
    %p42 = scmp.eq.s32.totalorder %s9, 0
    %p43 = por %p41, %p42
    %p44 = scmp.ne.s32.totalorder %s33, %s36
    %p45 = scmp.eq.s32.totalorder %s14, 1
    %p46 = por %p44, %p45
    %p47 = scmp.ne.s32.totalorder %s36, %s37
    %p48 = scmp.eq.s32.totalorder %s14, 0
    %p49 = por %p47, %p48
    %p50 = scmp.ne.s32.totalorder %s36, %s37
    %p51 = scmp.eq.s32.totalorder %s15, 1
    %p52 = por %p50, %p51
    %p54 = scmp.ne.s32.totalorder %s37, %s53
    %p55 = scmp.eq.s32.totalorder %s15, 0
    %p56 = por %p54, %p55
    %s57 = ssub.s32 %s16, %s28
    %p58 = scmp.eq.s32.totalorder %s57, 0
    %s60 = sadd.s32 %s59, 1
    %s61 = scalar_select %p58, %s59, %s60
    %p64 = pneg %p58
    %p65 = scmp.eq.s32.totalorder %s9, 1
    %p66 = por %p64, %p65
    %p67 = scmp.ne.s32.totalorder %s59, %s62
    %p68 = scmp.eq.s32.totalorder %s9, 0
    %p69 = por %p67, %p68
    %p70 = scmp.ne.s32.totalorder %s59, %s62
    %p71 = scmp.eq.s32.totalorder %s14, 1
    %p72 = por %p70, %p71
    %p73 = scmp.ne.s32.totalorder %s62, %s63
    %p74 = scmp.eq.s32.totalorder %s14, 0
    %p75 = por %p73, %p74
    %p76 = scmp.ne.s32.totalorder %s62, %s63
    %p77 = scmp.eq.s32.totalorder %s15, 1
    %p78 = por %p76, %p77
    %p80 = scmp.ne.s32.totalorder %s63, %s79
    %p81 = scmp.eq.s32.totalorder %s15, 0
    %p82 = por %p80, %p81
    %s83 = ssub.s32 %s16, %s28
    %p84 = scmp.eq.s32.totalorder %s83, 0
    %s86 = sadd.s32 %s85, 1
    %s87 = scalar_select %p84, %s85, %s86
    %p90 = pneg %p84
    %p91 = scmp.eq.s32.totalorder %s9, 1
    %p92 = por %p90, %p91
    %p93 = scmp.ne.s32.totalorder %s85, %s88
    %p94 = scmp.eq.s32.totalorder %s9, 0
    %p95 = por %p93, %p94
    %p96 = scmp.ne.s32.totalorder %s85, %s88
    %p97 = scmp.eq.s32.totalorder %s14, 1
    %p98 = por %p96, %p97
    %p99 = scmp.ne.s32.totalorder %s88, %s89
    %p100 = scmp.eq.s32.totalorder %s14, 0
    %p101 = por %p99, %p100
    %p102 = scmp.ne.s32.totalorder %s88, %s89
    %p103 = scmp.eq.s32.totalorder %s15, 1
    %p104 = por %p102, %p103
    %p106 = scmp.ne.s32.totalorder %s89, %s105
    %p107 = scmp.eq.s32.totalorder %s15, 0
    %p108 = por %p106, %p107
    %s109 = ssub.s32 %s17, %s24
    %s110 = ssub.s32 %s16, %s28
    %s111 = sor.u32 %s109, %s110
    %p112 = scmp.eq.s32.totalorder %s111, 0
    %s114 = sadd.s32 %s113, 1
    %s115 = scalar_select %p112, %s113, %s114
    %p118 = pneg %p112
    %p119 = scmp.eq.s32.totalorder %s9, 1
    %p120 = por %p118, %p119
    %p121 = scmp.ne.s32.totalorder %s113, %s116
    %p122 = scmp.eq.s32.totalorder %s9, 0
    %p123 = por %p121, %p122
    %p124 = scmp.ne.s32.totalorder %s113, %s116
    %p125 = scmp.eq.s32.totalorder %s14, 1
    %p126 = por %p124, %p125
    %p127 = scmp.ne.s32.totalorder %s116, %s117
    %p128 = scmp.eq.s32.totalorder %s14, 0
    %p129 = por %p127, %p128
    %p130 = scmp.ne.s32.totalorder %s116, %s117
    %p131 = scmp.eq.s32.totalorder %s15, 1
    %p132 = por %p130, %p131
    %p134 = scmp.ne.s32.totalorder %s117, %s133
    %p135 = scmp.eq.s32.totalorder %s15, 0
    %p136 = por %p134, %p135
    %p137 = scmp.le.s32.totalorder 1, %s9
    %p138 = scmp.lt.s32.totalorder %s9, 3
    %p139 = pnand %p137, %p138
    %p140 = pneg %p139
    // Predicated region
    $region9: #{tpu_custom_call.1} parent=5 // pred_check
      _
    $region10: #{tpu_custom_call.1} parent=5 // pred_check_branch
      %142 = sbr.rel (%p139) target = $region12
    $region11: #{tpu_custom_call.1} parent=5 // pred_region
      %s143 = ssub.s32 %s9, 1
      // Predicated region
      $region13: #{tpu_custom_call.1} parent=11 // pred_check
        %p144 = pneg %p75
      $region14: #{tpu_custom_call.1} parent=11 // pred_check_branch
        %146 = sbr.rel (%p144) target = $region16
      $region15: #{tpu_custom_call.1} parent=11 // pred_region
        %s147 = smul.u32 2, %s18
        %p148 = scmp.lt.s32.totalorder %s147, 1
        %s149 = scalar_select %p148, %s147, 1
        %s150 = smul.addr %s149, 8
        %s151 = scalar_lea.vmem %s1, %s150
        %s152 = smul.u32 2, %s18
      $region16: #{tpu_custom_call.1} parent=11 // pred_fallthru
        _
      // Predicated region
      $region17: #{tpu_custom_call.1} parent=11 // pred_check
        %p153 = pneg %p101
      $region18: #{tpu_custom_call.1} parent=11 // pred_check_branch
        %155 = sbr.rel (%p153) target = $region20
      $region19: #{tpu_custom_call.1} parent=11 // pred_region
        %s156 = smul.u32 2, %s18
        %p157 = scmp.lt.s32.totalorder %s156, 1
        %s158 = scalar_select %p157, %s156, 1
        %s159 = smul.addr %s158, 8
        %s160 = scalar_lea.vmem %s2, %s159
        %s161 = smul.u32 2, %s18
      $region20: #{tpu_custom_call.1} parent=11 // pred_fallthru
        _
    $region12: #{tpu_custom_call.1} parent=5 // pred_fallthru
      _
    %p162 = scmp.lt.s32.totalorder %s9, 2
    // Predicated region
    $region21: #{tpu_custom_call.1} parent=5 // pred_check
      %p163 = pneg %p162
    $region22: #{tpu_custom_call.1} parent=5 // pred_check_branch
      %165 = sbr.rel (%p163) target = $region24
    $region23: #{tpu_custom_call.1} parent=5 // pred_region
      // Predicated region
      $region25: #{tpu_custom_call.1} parent=23 // pred_check
        %p166 = pneg %p43
      $region26: #{tpu_custom_call.1} parent=23 // pred_check_branch
        %168 = sbr.rel (%p166) target = $region28
      $region27: #{tpu_custom_call.1} parent=23 // pred_region
        %s169 = smul.u32 2, %s16
        %p170 = scmp.lt.s32.totalorder %s17, 1
        %s171 = scalar_select %p170, %s17, 1
        %p172 = scmp.lt.s32.totalorder %s169, 1
        %s173 = scalar_select %p172, %s169, 1
        %s174 = smul.addr %s171, 4
        %s175 = sadd.s32 %s173, %s174
        %s176 = smul.addr %s175, 8
        %s177 = scalar_lea.vmem %s0, %s176
        %s178 = smul.u32 2, %s16
      $region28: #{tpu_custom_call.1} parent=23 // pred_fallthru
        _
    $region24: #{tpu_custom_call.1} parent=5 // pred_fallthru
      _
    %p179 = scmp.le.s32.totalorder 1, %s9
    %p180 = scmp.lt.s32.totalorder %s9, 3
    %p181 = pnand %p179, %p180
    %p182 = pneg %p181
    // Predicated region
    $region29: #{tpu_custom_call.1} parent=5 // pred_check
      _
    $region30: #{tpu_custom_call.1} parent=5 // pred_check_branch
      %184 = sbr.rel (%p181) target = $region32
    $region31: #{tpu_custom_call.1} parent=5 // pred_region
      %s185 = ssub.s32 %s9, 1
      %s186 = smul.u32 2, %s18
      %p187 = scmp.lt.s32.totalorder %s19, 1
      %s188 = scalar_select %p187, %s19, 1
      %p189 = scmp.lt.s32.totalorder %s186, 1
      %s190 = scalar_select %p189, %s186, 1
      %s191 = smul.addr %s188, 4
      %s192 = sadd.s32 %s190, %s191
      %s193 = smul.addr %s192, 8
      %s194 = scalar_lea.vmem %s0, %s193
      %p195 = pneg %p49
      %p196 = pneg %p46
      %s197 = smul.u32 2, %s18
      %p198 = scmp.lt.s32.totalorder %s197, 1
      %s199 = scalar_select %p198, %s197, 1
      %s200 = smul.addr %s199, 8
      %s201 = scalar_lea.vmem %s1, %s200
      %p202 = pneg %p75
      %p203 = pneg %p72
      %s204 = smul.u32 2, %s18
      %p205 = scmp.lt.s32.totalorder %s204, 1
      %s206 = scalar_select %p205, %s204, 1
      %s207 = smul.addr %s206, 8
      %s208 = scalar_lea.vmem %s2, %s207
      %p209 = pneg %p101
      %p210 = pneg %p98
      %p211 = pneg %p129
      %p212 = pneg %p126
      %s213 = smul.u32 2, %s18
      %p214 = scmp.lt.s32.totalorder %s19, 1
      %s215 = scalar_select %p214, %s19, 1
      %p216 = scmp.lt.s32.totalorder %s213, 1
      %s217 = scalar_select %p216, %s213, 1
      %s218 = smul.addr %s215, 4
      %s219 = sadd.s32 %s217, %s218
      %s220 = smul.addr %s219, 8
      %s221 = scalar_lea.vmem %s3, %s220
      %s222 = smul.u32 2, %s18
      %p223 = scmp.lt.s32.totalorder %s19, 1
      %s224 = scalar_select %p223, %s19, 1
      %p225 = scmp.lt.s32.totalorder %s222, 1
      %s226 = scalar_select %p225, %s222, 1
      %s227 = smul.addr %s224, 4
      %s228 = sadd.s32 %s226, %s227
      %s229 = smul.addr %s228, 8
      %s230 = scalar_lea.vmem %s0, %s229
      %s231 = smul.u32 2, %s18
      %s232 = smul.u32 2, %s18
      %p233 = scmp.lt.s32.totalorder %s232, 1
      %s234 = scalar_select %p233, %s232, 1
      %s235 = smul.addr %s234, 8
      %s236 = scalar_lea.vmem %s1, %s235
      %s237 = smul.u32 2, %s18
      %s238 = smul.u32 2, %s18
      %p239 = scmp.lt.s32.totalorder %s238, 1
      %s240 = scalar_select %p239, %s238, 1
      %s241 = smul.addr %s240, 8
      %s242 = scalar_lea.vmem %s2, %s241
      %s243 = smul.u32 2, %s18
      %s244 = smul.u32 2, %s18
      %p245 = scmp.lt.s32.totalorder %s19, 1
      %s246 = scalar_select %p245, %s19, 1
      %p247 = scmp.lt.s32.totalorder %s244, 1
      %s248 = scalar_select %p247, %s244, 1
      %s249 = smul.addr %s246, 4
      %s250 = sadd.s32 %s248, %s249
      %s251 = smul.addr %s250, 8
      %s252 = scalar_lea.vmem %s3, %s251
      %s253 = smul.u32 2, %s18
      %v254 = vld [vmem:[%s236] sm:$0xff]
      %v255 = vld [vmem:[%s236 + $0x8] sm:$0xff]
      %v256 = vld [vmem:[%s236 + $0x10] sm:$0xf]
      %v257 = vld [vmem:[%s236 + $0x18] sm:$0xf]
      %v258 = vld [vmem:[%s230] sm:$0xff]
      %v259 = vld [vmem:[%s230 + $0x8] sm:$0xff]
      %v260 = vld [vmem:[%s230 + $0x10] sm:$0xf]
      %v261 = vld [vmem:[%s230 + $0x18] sm:$0xf]
      %v262 = vmul.f32 %v254, %v258
      %v263 = vmul.f32 %v255, %v259
      %v264 = vmul.f32 %v256, %v260
      %v265 = vmul.f32 %v257, %v261
      %v266 = vld [vmem:[%s242] sm:$0xff]
      %v267 = vld [vmem:[%s242 + $0x8] sm:$0xff]
      %v268 = vld [vmem:[%s242 + $0x10] sm:$0xf]
      %v269 = vld [vmem:[%s242 + $0x18] sm:$0xf]
      %v270 = vadd.f32 %v262, %v266
      %v271 = vadd.f32 %v263, %v267
      %v272 = vadd.f32 %v264, %v268
      %v273 = vadd.f32 %v265, %v269
      %v274 = vlaneseq
      %v275 = vand.u32 %v274, 127
      %v276 = vadd.s32 %v275, 128
      %v277 = vand.u32 %v275, 1
      %v278 = vand.u32 %v276, 1
      %vm279 = vcmp.eq.s32.totalorder %v277, 0
      %vm280 = vcmp.eq.s32.totalorder %v278, 0
      %281 = vrot.lane.b32.xlu0 %v270, 127
      %v282 = vpop.permute.xlu0 %281
      %283 = vrot.lane.b32.xlu0 %v272, 127
      %v284 = vpop.permute.xlu0 %283
      %285 = vrot.lane.b32.xlu0 %v271, 127
      %v286 = vpop.permute.xlu0 %285
      %287 = vrot.lane.b32.xlu0 %v273, 127
      %v288 = vpop.permute.xlu0 %287
      %vm289 = vcmp.lt.s32.totalorder %v275, 127
      %v290 = vsel %vm289, %v282, %v286
      %v291 = vsel %vm289, %v284, %v288
      %v292 = vsel %vm289, %v286, %v282
      %v293 = vsel %vm289, %v288, %v284
      %294 = vrot.lane.b32.xlu0 %v270, 1
      %v295 = vpop.permute.xlu0 %294
      %296 = vrot.lane.b32.xlu0 %v272, 1
      %v297 = vpop.permute.xlu0 %296
      %298 = vrot.lane.b32.xlu0 %v271, 1
      %v299 = vpop.permute.xlu0 %298
      %300 = vrot.lane.b32.xlu0 %v273, 1
      %v301 = vpop.permute.xlu0 %300
      %vm302 = vcmp.lt.s32.totalorder %v275, 1
      %v303 = vsel %vm302, %v295, %v299
      %v304 = vsel %vm302, %v297, %v301
      %v305 = vsel %vm302, %v299, %v295
      %v306 = vsel %vm302, %v301, %v297
      %v307 = vsel %vm279, %v290, %v305
      %v308 = vsel %vm280, %v292, %v303
      %v309 = vsel %vm279, %v291, %v306
      %v310 = vsel %vm280, %v293, %v304
      %v311 = vadd.f32 %v270, %v307
      %v312 = vadd.f32 %v271, %v308
      %v313 = vadd.f32 %v272, %v309
      %v314 = vadd.f32 %v273, %v310
      %v315 = vand.u32 %v275, 16
      %v316 = vand.u32 %v276, 16
      %vm317 = vcmp.eq.s32.totalorder %v315, 0
      %vm318 = vcmp.eq.s32.totalorder %v316, 0
      %319 = vrot.lane.b32.xlu0 %v311, 112
      %v320 = vpop.permute.xlu0 %319
      %321 = vrot.lane.b32.xlu0 %v313, 112
      %v322 = vpop.permute.xlu0 %321
      %323 = vrot.lane.b32.xlu0 %v312, 112
      %v324 = vpop.permute.xlu0 %323
      %325 = vrot.lane.b32.xlu0 %v314, 112
      %v326 = vpop.permute.xlu0 %325
      %vm327 = vcmp.lt.s32.totalorder %v275, 112
      %v328 = vsel %vm327, %v320, %v324
      %v329 = vsel %vm327, %v322, %v326
      %v330 = vsel %vm327, %v324, %v320
      %v331 = vsel %vm327, %v326, %v322
      %332 = vrot.lane.b32.xlu0 %v311, 16
      %v333 = vpop.permute.xlu0 %332
      %334 = vrot.lane.b32.xlu0 %v313, 16
      %v335 = vpop.permute.xlu0 %334
      %336 = vrot.lane.b32.xlu0 %v312, 16
      %v337 = vpop.permute.xlu0 %336
      %338 = vrot.lane.b32.xlu0 %v314, 16
      %v339 = vpop.permute.xlu0 %338
      %vm340 = vcmp.lt.s32.totalorder %v275, 16
      %v341 = vsel %vm340, %v333, %v337
      %v342 = vsel %vm340, %v335, %v339
      %v343 = vsel %vm340, %v337, %v333
      %v344 = vsel %vm340, %v339, %v335
      %v345 = vsel %vm317, %v328, %v343
      %v346 = vsel %vm318, %v330, %v341
      %v347 = vsel %vm317, %v329, %v344
      %v348 = vsel %vm318, %v331, %v342
      %v349 = vadd.f32 %v311, %v345
      %v350 = vadd.f32 %v312, %v346
      %v351 = vadd.f32 %v313, %v347
      %v352 = vadd.f32 %v314, %v348
      %v353 = vmul.f32 %v349, 0.25
      %v354 = vmul.f32 %v350, 0.25
      %v355 = vmul.f32 %v351, 0.25
      %v356 = vmul.f32 %v352, 0.25
      %v357 = vadd.f32 %v270, %v353
      %v358 = vadd.f32 %v271, %v354
      %v359 = vadd.f32 %v272, %v355
      %v360 = vadd.f32 %v273, %v356
      %361 = vst [vmem:[%s252] sm:$0xff] %v357
      %362 = vst [vmem:[%s252 + $0x8] sm:$0xff] %v358
      %363 = vst [vmem:[%s252 + $0x10] sm:$0xf] %v359
      %364 = vst [vmem:[%s252 + $0x18] sm:$0xf] %v360
      %s365 = smul.u32 2, %s18
      %p366 = scmp.lt.s32.totalorder %s19, 1
      %s367 = scalar_select %p366, %s19, 1
      %p368 = scmp.lt.s32.totalorder %s365, 1
      %s369 = scalar_select %p368, %s365, 1
      %s370 = smul.addr %s367, 4
      %s371 = sadd.s32 %s369, %s370
      %s372 = smul.addr %s371, 8
      %s373 = scalar_lea.vmem %s3, %s372
      // Predicated region
      $region33: #{tpu_custom_call.1} parent=31 // pred_check
        %p374 = pneg %p126
      $region34: #{tpu_custom_call.1} parent=31 // pred_check_branch
        %376 = sbr.rel (%p374) target = $region36
      $region35: #{tpu_custom_call.1} parent=31 // pred_region
        %s377 = smul.u32 2, %s18
      $region36: #{tpu_custom_call.1} parent=31 // pred_fallthru
        _
    $region32: #{tpu_custom_call.1} parent=5 // pred_fallthru
      _
    %p378 = scmp.le.s32.totalorder 2, %s9
    // Predicated region
    $region37: #{tpu_custom_call.1} parent=5 // pred_check
      %p379 = pneg %p378
    $region38: #{tpu_custom_call.1} parent=5 // pred_check_branch
      %381 = sbr.rel (%p379) target = $region40
    $region39: #{tpu_custom_call.1} parent=5 // pred_region
      %s382 = ssub.s32 %s9, 2
      // Predicated region
      $region41: #{tpu_custom_call.1} parent=39 // pred_check
        %p383 = pneg %p132
      $region42: #{tpu_custom_call.1} parent=39 // pred_check_branch
        %385 = sbr.rel (%p383) target = $region44
      $region43: #{tpu_custom_call.1} parent=39 // pred_region
        %s386 = smul.u32 2, %s20
        %p387 = scmp.lt.s32.totalorder %s21, 1
        %s388 = scalar_select %p387, %s21, 1
        %p389 = scmp.lt.s32.totalorder %s386, 1
        %s390 = scalar_select %p389, %s386, 1
        %s391 = smul.addr %s388, 4
        %s392 = sadd.s32 %s390, %s391
        %s393 = smul.addr %s392, 8
        %s394 = scalar_lea.vmem %s3, %s393
      $region44: #{tpu_custom_call.1} parent=39 // pred_fallthru
        _
    $region40: #{tpu_custom_call.1} parent=5 // pred_fallthru
      _
  $region6: #{tpu_custom_call.1} parent=0 // loop_footer
    %s13 = sadd.s32 1, %s9
  $region7: #{tpu_custom_call.1} parent=0 // loop_footer_branch
    %8 = sbr.rel target = $region3
  $region8: #{tpu_custom_call.1} parent=0 // loop_exit
    _

</llo_original>
